<compile_context>
chip_gen: v6e
topology: v6e:2x2x1
jax: 0.10.0
libtpu: 0.0.40
codegen_flags: <defaults>
</compile_context>

<pallas_src>
import jax
import jax.numpy as jnp
from jax.experimental import pallas as pl
from jax.experimental.pallas import tpu as pltpu


def peg_kernel(x_ref, wb_ref, o_ref):
    # x_ref : (bt, H, W, tc)  unpadded input tile (batch block x channel slice)
    # wb_ref: (10, tc)        rows 0..8 = 3x3 taps (row 4 has +1 residual
    #                         folded in), row 9 = bias
    # o_ref : (bt, H, W, tc)
    BT, H, W, Ct = o_ref.shape
    f32 = jnp.float32

    x = x_ref[...].astype(f32)                         # one load of the tile
    wb = wb_ref[...].astype(f32)                       # (10, Ct)

    # Column (W = sublane axis) shifted variants, zero at the image border.
    zcol = jnp.zeros((BT, H, 1, Ct), f32)
    xl = jnp.concatenate([zcol, x[:, :, :W - 1, :]], axis=2)   # x[.., w-1, .]
    xr = jnp.concatenate([x[:, :, 1:, :], zcol], axis=2)       # x[.., w+1, .]

    # Row (H = major axis) shifts, zero at the image border.
    zrow = jnp.zeros((BT, 1, W, Ct), f32)

    def up(a):        # value at h comes from h-1
        return jnp.concatenate([zrow, a[:, :H - 1]], axis=1)

    def down(a):      # value at h comes from h+1
        return jnp.concatenate([a[:, 1:], zrow], axis=1)

    # init accumulator with the bias, then nine per-channel multiply-adds.
    acc = jnp.broadcast_to(wb[9], (BT, H, W, Ct))
    acc = acc + up(xl) * wb[0] + up(x) * wb[1] + up(xr) * wb[2]
    acc = acc + xl * wb[3] + x * wb[4] + xr * wb[5]
    acc = acc + down(xl) * wb[6] + down(x) * wb[7] + down(xr) * wb[8]

    o_ref[...] = acc.astype(o_ref.dtype)


def peg_pallas(x, H, W, weight, bias):
    """x: (B, N, C) with N == H*W; weight: (C, 1, 3, 3); bias: (C,)."""
    B, N, C = x.shape
    assert N == H * W
    dtype = x.dtype
    itemsize = jnp.dtype(dtype).itemsize

    # (B, N, C) -> (B, H, W, C): channel-last so C sits on the 128-lane axis.
    xs = x.reshape(B, H, W, C)

    # torch depthwise weight (C, 1, 3, 3) -> (3, 3, C) -> (9, C)
    w = jnp.transpose(weight.reshape(C, 3, 3), (1, 2, 0)).reshape(9, C)
    # fold the residual (identity) into the center tap: proj(x) + x
    w = w.at[4].add(1.0)
    # single fused constants operand: 9 taps + bias -> (10, C)
    wb = jnp.concatenate([w, bias.reshape(1, C)], axis=0).astype(jnp.float32)

    # Lane-dense channels: pad C up to a multiple of 128 (PCPVT dims 64/320).
    Cp = ((C + 127) // 128) * 128
    if Cp != C:
        xs = jnp.pad(xs, ((0, 0), (0, 0), (0, 0), (0, Cp - C)))
        wb = jnp.pad(wb, ((0, 0), (0, Cp - C)))

    # Channel tile: largest 128-multiple divisor of Cp whose double-buffered
    # in+out working set stays within a ~4 MiB per-step budget.
    budget = 4 << 20
    tc = 128
    t = 128
    while t <= Cp:
        if Cp % t == 0 and 4 * H * W * t * itemsize <= budget:
            tc = t
        t += 128
    nc = Cp // tc

    # Fold batch elements into a block when the spatial x channel tile is tiny.
    base = H * W * tc * itemsize
    cap = max(1, (2 << 20) // max(base, 1))
    bt = 1
    for cand in range(min(B, cap), 0, -1):
        if B % cand == 0:
            bt = cand
            break
    nb = B // bt

    grid_spec = pltpu.PrefetchScalarGridSpec(
        num_scalar_prefetch=0,
        grid=(nc, nb),                       # C-tiles outer: wb stays resident
        in_specs=[
            pl.BlockSpec((bt, H, W, tc), lambda j, i: (i, 0, 0, j)),
            pl.BlockSpec((10, tc), lambda j, i: (0, j)),
        ],
        out_specs=pl.BlockSpec((bt, H, W, tc), lambda j, i: (i, 0, 0, j)),
    )

    out = pl.pallas_call(
        peg_kernel,
        out_shape=jax.ShapeDtypeStruct((B, H, W, Cp), dtype),
        grid_spec=grid_spec,
        compiler_params=pltpu.CompilerParams(
            dimension_semantics=("parallel", "parallel"),
            vmem_limit_bytes=48 * 1024 * 1024),
    )(xs, wb)

    if Cp != C:
        out = out[..., :C]
    return out.reshape(B, N, C)


def peg_ref(x, H, W, weight, bias):
    """Pure-JAX mirror of the PyTorch PEG forward (depthwise 3x3 + residual)."""
    B, N, C = x.shape
    cnn = x.reshape(B, H, W, C)
    xp = jnp.pad(cnn, ((0, 0), (1, 1), (1, 1), (0, 0)))
    w = jnp.transpose(weight.reshape(C, 3, 3), (1, 2, 0))        # (3, 3, C)
    y = jnp.zeros_like(cnn)
    for dh in range(3):
        for dw in range(3):
            y = y + xp[:, dh:dh + H, dw:dw + W, :] * w[dh, dw]
    y = y + bias[None, None, None, :] + cnn                      # conv + bias + residual
    return y.reshape(B, N, C)


if __name__ == "__main__":
    key = jax.random.PRNGKey(0)

    # (1) module-default channel count (C=256, lane-exact path)
    # (2) PCPVT stage-1 channel count (C=64, exercises the C->128 pad path)
    for (B, H, W, C) in [(2, 8, 8, 256), (2, 8, 8, 64)]:
        k_x, k_w, k_b, key = jax.random.split(key, 4)
        N = H * W
        x = jax.random.normal(k_x, (B, N, C), jnp.float32)
        weight = 0.1 * jax.random.normal(k_w, (C, 1, 3, 3), jnp.float32)
        bias = 0.1 * jax.random.normal(k_b, (C,), jnp.float32)

        out = peg_pallas(x, H, W, weight, bias)
        out = jax.block_until_ready(out)

        ref = peg_ref(x, H, W, weight, bias)
        assert out.shape == (B, N, C)
        assert jnp.allclose(out, ref, atol=1e-4, rtol=1e-4), \
            f"max abs err {jnp.max(jnp.abs(out - ref))} at C={C}"

    print("KERNEL_OK")
</pallas_src>

<mosaic_0001>
module attributes {stable_mosaic.version = 11 : i64} {
  func.func @peg_kernel(%arg0: i32, %arg1: i32, %arg2: memref<2x8x8x256xf32, #tpu.memory_space<vmem>>, %arg3: memref<10x256xf32, #tpu.memory_space<vmem>>, %arg4: memref<2x8x8x256xf32, #tpu.memory_space<vmem>>) attributes {dimension_semantics = [#tpu.dimension_semantics<parallel>, #tpu.dimension_semantics<parallel>], iteration_bounds = array<i64: 1, 1>, scalar_prefetch = 0 : i64, scratch_operands = 0 : i64, tpu.core_type = #tpu.core_type<tc>, window_params = [{transform_indices = @transform_0, window_bounds = array<i64: 2, 8, 8, 256>}, {transform_indices = @transform_1, window_bounds = array<i64: 10, 256>}, {transform_indices = @transform_2, window_bounds = array<i64: 2, 8, 8, 256>}]} {
    %c0 = arith.constant 0 : index
    %c0_0 = arith.constant 0 : index
    %c0_1 = arith.constant 0 : index
    %c0_2 = arith.constant 0 : index
    %0 = vector.load %arg2[%c0, %c0_0, %c0_1, %c0_2] : memref<2x8x8x256xf32, #tpu.memory_space<vmem>>, vector<2x8x8x256xf32>
    %c0_3 = arith.constant 0 : index
    %c0_4 = arith.constant 0 : index
    %1 = vector.load %arg3[%c0_3, %c0_4] : memref<10x256xf32, #tpu.memory_space<vmem>>, vector<10x256xf32>
    %cst = arith.constant 0.000000e+00 : f32
    %2 = vector.broadcast %cst : f32 to vector<2x8x1x256xf32>
    %3 = vector.extract_strided_slice %0 {offsets = [0, 0, 0, 0], sizes = [2, 8, 7, 256], strides = [1, 1, 1, 1]} : vector<2x8x8x256xf32> to vector<2x8x7x256xf32>
    %4 = tpu.concatenate %2, %3 in 2 : vector<2x8x1x256xf32>, vector<2x8x7x256xf32> -> vector<2x8x8x256xf32>
    %5 = vector.extract_strided_slice %0 {offsets = [0, 0, 1, 0], sizes = [2, 8, 7, 256], strides = [1, 1, 1, 1]} : vector<2x8x8x256xf32> to vector<2x8x7x256xf32>
    %6 = tpu.concatenate %5, %2 in 2 : vector<2x8x7x256xf32>, vector<2x8x1x256xf32> -> vector<2x8x8x256xf32>
    %cst_5 = arith.constant 0.000000e+00 : f32
    %7 = vector.broadcast %cst_5 : f32 to vector<2x1x8x256xf32>
    %8 = vector.extract_strided_slice %1 {offsets = [9, 0], sizes = [1, 256], strides = [1, 1]} : vector<10x256xf32> to vector<1x256xf32>
    %9 = vector.shape_cast %8 : vector<1x256xf32> to vector<256xf32>
    %10 = vector.shape_cast %9 : vector<256xf32> to vector<1x1x1x256xf32>
    %11 = vector.broadcast %10 : vector<1x1x1x256xf32> to vector<2x8x8x256xf32>
    %12 = vector.extract_strided_slice %4 {offsets = [0, 0, 0, 0], sizes = [2, 7, 8, 256], strides = [1, 1, 1, 1]} : vector<2x8x8x256xf32> to vector<2x7x8x256xf32>
    %13 = tpu.concatenate %7, %12 in 1 : vector<2x1x8x256xf32>, vector<2x7x8x256xf32> -> vector<2x8x8x256xf32>
    %14 = vector.extract_strided_slice %1 {offsets = [0, 0], sizes = [1, 256], strides = [1, 1]} : vector<10x256xf32> to vector<1x256xf32>
    %15 = vector.shape_cast %14 : vector<1x256xf32> to vector<256xf32>
    %16 = vector.shape_cast %15 : vector<256xf32> to vector<1x1x1x256xf32>
    %17 = vector.broadcast %16 : vector<1x1x1x256xf32> to vector<2x8x8x256xf32>
    %18 = arith.mulf %13, %17 : vector<2x8x8x256xf32>
    %19 = arith.addf %11, %18 : vector<2x8x8x256xf32>
    %20 = vector.extract_strided_slice %0 {offsets = [0, 0, 0, 0], sizes = [2, 7, 8, 256], strides = [1, 1, 1, 1]} : vector<2x8x8x256xf32> to vector<2x7x8x256xf32>
    %21 = tpu.concatenate %7, %20 in 1 : vector<2x1x8x256xf32>, vector<2x7x8x256xf32> -> vector<2x8x8x256xf32>
    %22 = vector.extract_strided_slice %1 {offsets = [1, 0], sizes = [1, 256], strides = [1, 1]} : vector<10x256xf32> to vector<1x256xf32>
    %23 = vector.shape_cast %22 : vector<1x256xf32> to vector<256xf32>
    %24 = vector.shape_cast %23 : vector<256xf32> to vector<1x1x1x256xf32>
    %25 = vector.broadcast %24 : vector<1x1x1x256xf32> to vector<2x8x8x256xf32>
    %26 = arith.mulf %21, %25 : vector<2x8x8x256xf32>
    %27 = arith.addf %19, %26 : vector<2x8x8x256xf32>
    %28 = vector.extract_strided_slice %6 {offsets = [0, 0, 0, 0], sizes = [2, 7, 8, 256], strides = [1, 1, 1, 1]} : vector<2x8x8x256xf32> to vector<2x7x8x256xf32>
    %29 = tpu.concatenate %7, %28 in 1 : vector<2x1x8x256xf32>, vector<2x7x8x256xf32> -> vector<2x8x8x256xf32>
    %30 = vector.extract_strided_slice %1 {offsets = [2, 0], sizes = [1, 256], strides = [1, 1]} : vector<10x256xf32> to vector<1x256xf32>
    %31 = vector.shape_cast %30 : vector<1x256xf32> to vector<256xf32>
    %32 = vector.shape_cast %31 : vector<256xf32> to vector<1x1x1x256xf32>
    %33 = vector.broadcast %32 : vector<1x1x1x256xf32> to vector<2x8x8x256xf32>
    %34 = arith.mulf %29, %33 : vector<2x8x8x256xf32>
    %35 = arith.addf %27, %34 : vector<2x8x8x256xf32>
    %36 = vector.extract_strided_slice %1 {offsets = [3, 0], sizes = [1, 256], strides = [1, 1]} : vector<10x256xf32> to vector<1x256xf32>
    %37 = vector.shape_cast %36 : vector<1x256xf32> to vector<256xf32>
    %38 = vector.shape_cast %37 : vector<256xf32> to vector<1x1x1x256xf32>
    %39 = vector.broadcast %38 : vector<1x1x1x256xf32> to vector<2x8x8x256xf32>
    %40 = arith.mulf %4, %39 : vector<2x8x8x256xf32>
    %41 = arith.addf %35, %40 : vector<2x8x8x256xf32>
    %42 = vector.extract_strided_slice %1 {offsets = [4, 0], sizes = [1, 256], strides = [1, 1]} : vector<10x256xf32> to vector<1x256xf32>
    %43 = vector.shape_cast %42 : vector<1x256xf32> to vector<256xf32>
    %44 = vector.shape_cast %43 : vector<256xf32> to vector<1x1x1x256xf32>
    %45 = vector.broadcast %44 : vector<1x1x1x256xf32> to vector<2x8x8x256xf32>
    %46 = arith.mulf %0, %45 : vector<2x8x8x256xf32>
    %47 = arith.addf %41, %46 : vector<2x8x8x256xf32>
    %48 = vector.extract_strided_slice %1 {offsets = [5, 0], sizes = [1, 256], strides = [1, 1]} : vector<10x256xf32> to vector<1x256xf32>
    %49 = vector.shape_cast %48 : vector<1x256xf32> to vector<256xf32>
    %50 = vector.shape_cast %49 : vector<256xf32> to vector<1x1x1x256xf32>
    %51 = vector.broadcast %50 : vector<1x1x1x256xf32> to vector<2x8x8x256xf32>
    %52 = arith.mulf %6, %51 : vector<2x8x8x256xf32>
    %53 = arith.addf %47, %52 : vector<2x8x8x256xf32>
    %54 = vector.extract_strided_slice %4 {offsets = [0, 1, 0, 0], sizes = [2, 7, 8, 256], strides = [1, 1, 1, 1]} : vector<2x8x8x256xf32> to vector<2x7x8x256xf32>
    %55 = tpu.concatenate %54, %7 in 1 : vector<2x7x8x256xf32>, vector<2x1x8x256xf32> -> vector<2x8x8x256xf32>
    %56 = vector.extract_strided_slice %1 {offsets = [6, 0], sizes = [1, 256], strides = [1, 1]} : vector<10x256xf32> to vector<1x256xf32>
    %57 = vector.shape_cast %56 : vector<1x256xf32> to vector<256xf32>
    %58 = vector.shape_cast %57 : vector<256xf32> to vector<1x1x1x256xf32>
    %59 = vector.broadcast %58 : vector<1x1x1x256xf32> to vector<2x8x8x256xf32>
    %60 = arith.mulf %55, %59 : vector<2x8x8x256xf32>
    %61 = arith.addf %53, %60 : vector<2x8x8x256xf32>
    %62 = vector.extract_strided_slice %0 {offsets = [0, 1, 0, 0], sizes = [2, 7, 8, 256], strides = [1, 1, 1, 1]} : vector<2x8x8x256xf32> to vector<2x7x8x256xf32>
    %63 = tpu.concatenate %62, %7 in 1 : vector<2x7x8x256xf32>, vector<2x1x8x256xf32> -> vector<2x8x8x256xf32>
    %64 = vector.extract_strided_slice %1 {offsets = [7, 0], sizes = [1, 256], strides = [1, 1]} : vector<10x256xf32> to vector<1x256xf32>
    %65 = vector.shape_cast %64 : vector<1x256xf32> to vector<256xf32>
    %66 = vector.shape_cast %65 : vector<256xf32> to vector<1x1x1x256xf32>
    %67 = vector.broadcast %66 : vector<1x1x1x256xf32> to vector<2x8x8x256xf32>
    %68 = arith.mulf %63, %67 : vector<2x8x8x256xf32>
    %69 = arith.addf %61, %68 : vector<2x8x8x256xf32>
    %70 = vector.extract_strided_slice %6 {offsets = [0, 1, 0, 0], sizes = [2, 7, 8, 256], strides = [1, 1, 1, 1]} : vector<2x8x8x256xf32> to vector<2x7x8x256xf32>
    %71 = tpu.concatenate %70, %7 in 1 : vector<2x7x8x256xf32>, vector<2x1x8x256xf32> -> vector<2x8x8x256xf32>
    %72 = vector.extract_strided_slice %1 {offsets = [8, 0], sizes = [1, 256], strides = [1, 1]} : vector<10x256xf32> to vector<1x256xf32>
    %73 = vector.shape_cast %72 : vector<1x256xf32> to vector<256xf32>
    %74 = vector.shape_cast %73 : vector<256xf32> to vector<1x1x1x256xf32>
    %75 = vector.broadcast %74 : vector<1x1x1x256xf32> to vector<2x8x8x256xf32>
    %76 = arith.mulf %71, %75 : vector<2x8x8x256xf32>
    %77 = arith.addf %69, %76 : vector<2x8x8x256xf32>
    %c0_6 = arith.constant 0 : index
    %c0_7 = arith.constant 0 : index
    %c0_8 = arith.constant 0 : index
    %c0_9 = arith.constant 0 : index
    %78 = vector.load %arg4[%c0_6, %c0_7, %c0_8, %c0_9] : memref<2x8x8x256xf32, #tpu.memory_space<vmem>>, vector<2x8x8x256xf32>
    tpu.vector_store %arg4[%c0_6, %c0_7, %c0_8, %c0_9], %77 {strides = array<i32>} : memref<2x8x8x256xf32, #tpu.memory_space<vmem>>, vector<2x8x8x256xf32>,
    return
  }
  func.func @transform_0(%arg0: i32, %arg1: i32) -> (i32, i32, i32, i32) {
    %c0_i32 = arith.constant 0 : i32
    %c0_i32_0 = arith.constant 0 : i32
    %c0_i32_1 = arith.constant 0 : i32
    return %arg1, %c0_i32, %c0_i32_0, %arg0 : i32, i32, i32, i32
  }
  func.func @transform_1(%arg0: i32, %arg1: i32) -> (i32, i32) {
    %c0_i32 = arith.constant 0 : i32
    %c0_i32_0 = arith.constant 0 : i32
    return %c0_i32, %arg0 : i32, i32
  }
  func.func @transform_2(%arg0: i32, %arg1: i32) -> (i32, i32, i32, i32) {
    %c0_i32 = arith.constant 0 : i32
    %c0_i32_0 = arith.constant 0 : i32
    %c0_i32_1 = arith.constant 0 : i32
    return %arg1, %c0_i32, %c0_i32_0, %arg0 : i32, i32, i32, i32
  }
}

</mosaic_0001>

<llo_original>
// kernel: tpu_custom_call.1
$region0: #{tpu_custom_call.1}
  #allocation0 [shape = 'u32[]', space=smem, size = 0x4, offset = 0x4, fixed_abs, tag = 'smem constant byte address 0x4 - core index']
  #allocation1 [shape = 'u32[144,128]{1,0:T(1,128)}', space=vmem, size = 0x12000, scoped, tag = 'internal scratch']
  %s0 = inlined_call_operand.hbm [shape: f32[2,8,8,256], index: 0, kind: input, shape index: {}]
  %s1 = inlined_call_operand.hbm [shape: f32[10,256], index: 1, kind: input, shape index: {}]
  %s2 = inlined_call_operand.hbm [shape: f32[2,8,8,256], index: 2, kind: output, shape index: {}]
  %s3 = sld [smem:[#allocation0]]
  $region26: #{tpu_custom_call.1} parent=0
    _
  %s5 = ssub.s32 1, %s3
  %s6 = scalar_select 0, %s5, %s3
  $region1: #{tpu_custom_call.1} parent=0
    #allocation2 [shape = 'u8[131072]{0}', space=vmem, size = 0x20000, scoped, tag = 'input window, operand 0, single buffered']
    #allocation3 [shape = 's32[1]{0}', space=sflag, size = 0x4, scoped, tag = 'scoped memory for tpu_custom_call.1']
    #allocation4 [shape = 's32[1]{0}', space=sflag, size = 0x4, scoped, tag = 'scoped memory for tpu_custom_call.1']
    #allocation5 [shape = 'u8[16384]{0}', space=vmem, size = 0x4000, scoped, tag = 'input window, operand 1, single buffered']
    #allocation6 [shape = 's32[1]{0}', space=sflag, size = 0x4, scoped, tag = 'scoped memory for tpu_custom_call.1']
    #allocation7 [shape = 'u8[131072]{0}', space=vmem, size = 0x20000, scoped, tag = 'output window, operand 0, single buffered']
    %7 = vsyncpa [#allocation3], 0
    %8 = vsyncpa [#allocation6], 0
    %9 = vsyncpa [#allocation4], 0
    // Predicated region
    $region2: #{tpu_custom_call.1} parent=1 // pred_check
      _
    $region3: #{tpu_custom_call.1} parent=1 // pred_check_branch
      %11 = sbr.rel (0) target = $region5
    $region4: #{tpu_custom_call.1} parent=1 // pred_region
      %s13 = ssub.s32 4096, 4096
      %14 = vsyncadd [#allocation3], %s13
      %s15 = sshll.u32 [#allocation2], 4
      %s16 = int_to_ptr.vmem [resolvable:$true] %s15
      %21 = dma.hbm_to_vmem [thread:$0]  %s0, 4096, %s16, [#allocation3], 256, 256, 16
    $region5: #{tpu_custom_call.1} parent=1 // pred_fallthru
      _
    // Predicated region
    $region6: #{tpu_custom_call.1} parent=1 // pred_check
      _
    $region7: #{tpu_custom_call.1} parent=1 // pred_check_branch
      %23 = sbr.rel (0) target = $region9
    $region8: #{tpu_custom_call.1} parent=1 // pred_region
      %s25 = ssub.s32 512, 512
      %26 = vsyncadd [#allocation6], %s25
      %s27 = sshll.u32 [#allocation5], 4
      %s28 = int_to_ptr.vmem [resolvable:$true] %s27
      %33 = dma.hbm_to_vmem [thread:$0]  %s1, 512, %s28, [#allocation6], 256, 256, 16
    $region9: #{tpu_custom_call.1} parent=1 // pred_fallthru
      _
    // Predicated region
    $region10: #{tpu_custom_call.1} parent=1 // pred_check
      _
    $region11: #{tpu_custom_call.1} parent=1 // pred_check_branch
      %35 = sbr.rel (0) target = $region13
    $region12: #{tpu_custom_call.1} parent=1 // pred_region
      %36 = dma.done [#allocation3], 4096
    $region13: #{tpu_custom_call.1} parent=1 // pred_fallthru
      _
    // Predicated region
    $region14: #{tpu_custom_call.1} parent=1 // pred_check
      _
    $region15: #{tpu_custom_call.1} parent=1 // pred_check_branch
      %38 = sbr.rel (0) target = $region17
    $region16: #{tpu_custom_call.1} parent=1 // pred_region
      %39 = dma.done [#allocation6], 512
    $region17: #{tpu_custom_call.1} parent=1 // pred_fallthru
      _
    %v40 = vld [vmem:[#allocation2] sm:$0xff]
    %v41 = vld [vmem:[#allocation2 + $0x8] sm:$0xff]
    %v42 = vld [vmem:[#allocation2 + $0x10] sm:$0xff]
    %v43 = vld [vmem:[#allocation2 + $0x18] sm:$0xff]
    %v44 = vld [vmem:[#allocation2 + $0x20] sm:$0xff]
    %v45 = vld [vmem:[#allocation2 + $0x28] sm:$0xff]
    %v46 = vld [vmem:[#allocation2 + $0x30] sm:$0xff]
    %v47 = vld [vmem:[#allocation2 + $0x38] sm:$0xff]
    %v48 = vld [vmem:[#allocation2 + $0x40] sm:$0xff]
    %v49 = vld [vmem:[#allocation2 + $0x48] sm:$0xff]
    %v50 = vld [vmem:[#allocation2 + $0x50] sm:$0xff]
    %v51 = vld [vmem:[#allocation2 + $0x58] sm:$0xff]
    %v52 = vld [vmem:[#allocation2 + $0x60] sm:$0xff]
    %v53 = vld [vmem:[#allocation2 + $0x68] sm:$0xff]
    %v54 = vld [vmem:[#allocation2 + $0x70] sm:$0xff]
    %v55 = vld [vmem:[#allocation2 + $0x78] sm:$0xff]
    %v56 = vld [vmem:[#allocation2 + $0x80] sm:$0xff]
    %v57 = vld [vmem:[#allocation2 + $0x88] sm:$0xff]
    %v58 = vld [vmem:[#allocation2 + $0x90] sm:$0xff]
    %v59 = vld [vmem:[#allocation2 + $0x98] sm:$0xff]
    %v60 = vld [vmem:[#allocation2 + $0xa0] sm:$0xff]
    %v61 = vld [vmem:[#allocation2 + $0xa8] sm:$0xff]
    %v62 = vld [vmem:[#allocation2 + $0xb0] sm:$0xff]
    %v63 = vld [vmem:[#allocation2 + $0xb8] sm:$0xff]
    %v64 = vld [vmem:[#allocation2 + $0xc0] sm:$0xff]
    %v65 = vld [vmem:[#allocation2 + $0xc8] sm:$0xff]
    %v66 = vld [vmem:[#allocation2 + $0xd0] sm:$0xff]
    %v67 = vld [vmem:[#allocation2 + $0xd8] sm:$0xff]
    %v68 = vld [vmem:[#allocation2 + $0xe0] sm:$0xff]
    %v69 = vld [vmem:[#allocation2 + $0xe8] sm:$0xff]
    %v70 = vld [vmem:[#allocation2 + $0xf0] sm:$0xff]
    %v71 = vld [vmem:[#allocation2 + $0xf8] sm:$0xff]
    %v72 = vld [vmem:[#allocation5] sm:$0xff]
    %v73 = vld [vmem:[#allocation5 + $0x8] sm:$0xff]
    %v74 = vld [vmem:[#allocation5 + $0x10] sm:$0x3]
    %v75 = vld [vmem:[#allocation5 + $0x18] sm:$0x3]
    %v108 = vrot.slane %v40, 7
    %v109 = vrot.slane %v41, 7
    %v110 = vrot.slane %v42, 7
    %v111 = vrot.slane %v43, 7
    %v112 = vrot.slane %v44, 7
    %v113 = vrot.slane %v45, 7
    %v114 = vrot.slane %v46, 7
    %v115 = vrot.slane %v47, 7
    %v116 = vrot.slane %v48, 7
    %v117 = vrot.slane %v49, 7
    %v118 = vrot.slane %v50, 7
    %v119 = vrot.slane %v51, 7
    %v120 = vrot.slane %v52, 7
    %v121 = vrot.slane %v53, 7
    %v122 = vrot.slane %v54, 7
    %v123 = vrot.slane %v55, 7
    %v124 = vrot.slane %v56, 7
    %v125 = vrot.slane %v57, 7
    %v126 = vrot.slane %v58, 7
    %v127 = vrot.slane %v59, 7
    %v128 = vrot.slane %v60, 7
    %v129 = vrot.slane %v61, 7
    %v130 = vrot.slane %v62, 7
    %v131 = vrot.slane %v63, 7
    %v132 = vrot.slane %v64, 7
    %v133 = vrot.slane %v65, 7
    %v134 = vrot.slane %v66, 7
    %v135 = vrot.slane %v67, 7
    %v136 = vrot.slane %v68, 7
    %v137 = vrot.slane %v69, 7
    %v138 = vrot.slane %v70, 7
    %v139 = vrot.slane %v71, 7
    %vm172 = vcmask 1040384
    %v173 = vsel %vm172, 0.0, %v108
    %v174 = vsel %vm172, 0.0, %v109
    %v175 = vsel %vm172, 0.0, %v110
    %v176 = vsel %vm172, 0.0, %v111
    %v177 = vsel %vm172, 0.0, %v112
    %v178 = vsel %vm172, 0.0, %v113
    %v179 = vsel %vm172, 0.0, %v114
    %v180 = vsel %vm172, 0.0, %v115
    %v181 = vsel %vm172, 0.0, %v116
    %v182 = vsel %vm172, 0.0, %v117
    %v183 = vsel %vm172, 0.0, %v118
    %v184 = vsel %vm172, 0.0, %v119
    %v185 = vsel %vm172, 0.0, %v120
    %v186 = vsel %vm172, 0.0, %v121
    %v187 = vsel %vm172, 0.0, %v122
    %v188 = vsel %vm172, 0.0, %v123
    %v189 = vsel %vm172, 0.0, %v124
    %v190 = vsel %vm172, 0.0, %v125
    %v191 = vsel %vm172, 0.0, %v126
    %v192 = vsel %vm172, 0.0, %v127
    %v193 = vsel %vm172, 0.0, %v128
    %v194 = vsel %vm172, 0.0, %v129
    %v195 = vsel %vm172, 0.0, %v130
    %v196 = vsel %vm172, 0.0, %v131
    %v197 = vsel %vm172, 0.0, %v132
    %v198 = vsel %vm172, 0.0, %v133
    %v199 = vsel %vm172, 0.0, %v134
    %v200 = vsel %vm172, 0.0, %v135
    %v201 = vsel %vm172, 0.0, %v136
    %v202 = vsel %vm172, 0.0, %v137
    %v203 = vsel %vm172, 0.0, %v138
    %v204 = vsel %vm172, 0.0, %v139
    %v205 = vrot.slane %v40, 1
    %v206 = vrot.slane %v41, 1
    %v207 = vrot.slane %v42, 1
    %v208 = vrot.slane %v43, 1
    %v209 = vrot.slane %v44, 1
    %v210 = vrot.slane %v45, 1
    %v211 = vrot.slane %v46, 1
    %v212 = vrot.slane %v47, 1
    %v213 = vrot.slane %v48, 1
    %v214 = vrot.slane %v49, 1
    %v215 = vrot.slane %v50, 1
    %v216 = vrot.slane %v51, 1
    %v217 = vrot.slane %v52, 1
    %v218 = vrot.slane %v53, 1
    %v219 = vrot.slane %v54, 1
    %v220 = vrot.slane %v55, 1
    %v221 = vrot.slane %v56, 1
    %v222 = vrot.slane %v57, 1
    %v223 = vrot.slane %v58, 1
    %v224 = vrot.slane %v59, 1
    %v225 = vrot.slane %v60, 1
    %v226 = vrot.slane %v61, 1
    %v227 = vrot.slane %v62, 1
    %v228 = vrot.slane %v63, 1
    %v229 = vrot.slane %v64, 1
    %v230 = vrot.slane %v65, 1
    %v231 = vrot.slane %v66, 1
    %v232 = vrot.slane %v67, 1
    %v233 = vrot.slane %v68, 1
    %v234 = vrot.slane %v69, 1
    %v235 = vrot.slane %v70, 1
    %v236 = vrot.slane %v71, 1
    %vm269 = vcmask 1046528
    %v270 = vsel %vm269, %v205, 0.0
    %v271 = vsel %vm269, %v206, 0.0
    %v272 = vsel %vm269, %v207, 0.0
    %v273 = vsel %vm269, %v208, 0.0
    %v274 = vsel %vm269, %v209, 0.0
    %v275 = vsel %vm269, %v210, 0.0
    %v276 = vsel %vm269, %v211, 0.0
    %v277 = vsel %vm269, %v212, 0.0
    %v278 = vsel %vm269, %v213, 0.0
    %v279 = vsel %vm269, %v214, 0.0
    %v280 = vsel %vm269, %v215, 0.0
    %v281 = vsel %vm269, %v216, 0.0
    %v282 = vsel %vm269, %v217, 0.0
    %v283 = vsel %vm269, %v218, 0.0
    %v284 = vsel %vm269, %v219, 0.0
    %v285 = vsel %vm269, %v220, 0.0
    %v286 = vsel %vm269, %v221, 0.0
    %v287 = vsel %vm269, %v222, 0.0
    %v288 = vsel %vm269, %v223, 0.0
    %v289 = vsel %vm269, %v224, 0.0
    %v290 = vsel %vm269, %v225, 0.0
    %v291 = vsel %vm269, %v226, 0.0
    %v292 = vsel %vm269, %v227, 0.0
    %v293 = vsel %vm269, %v228, 0.0
    %v294 = vsel %vm269, %v229, 0.0
    %v295 = vsel %vm269, %v230, 0.0
    %v296 = vsel %vm269, %v231, 0.0
    %v297 = vsel %vm269, %v232, 0.0
    %v298 = vsel %vm269, %v233, 0.0
    %v299 = vsel %vm269, %v234, 0.0
    %v300 = vsel %vm269, %v235, 0.0
    %v301 = vsel %vm269, %v236, 0.0
    %v302 = vlaneseq
    %v303 = vshrl.u32 %v302, 7
    %v304 = vsub.s32 1, %v303
    %v305 = vrot.slane %v74, %v304
    %v306 = vlaneseq
    %v307 = vshrl.u32 %v306, 7
    %v308 = vsub.s32 1, %v307
    %v309 = vrot.slane %v75, %v308
    %v310 = vlaneseq
    %v311 = vshrl.u32 %v310, 7
    %v312 = vsub.s32 0, %v311
    %v313 = vrot.slane %v72, %v312
    %v314 = vlaneseq
    %v315 = vshrl.u32 %v314, 7
    %v316 = vsub.s32 0, %v315
    %v317 = vrot.slane %v73, %v316
    %v318 = vmul.f32 %v313, 0.0
    %v319 = vmul.f32 %v317, 0.0
    %v320 = vmul.f32 %v173, %v313
    %v321 = vmul.f32 %v174, %v317
    %v322 = vmul.f32 %v175, %v313
    %v323 = vmul.f32 %v176, %v317
    %v324 = vmul.f32 %v177, %v313
    %v325 = vmul.f32 %v178, %v317
    %v326 = vmul.f32 %v179, %v313
    %v327 = vmul.f32 %v180, %v317
    %v328 = vmul.f32 %v181, %v313
    %v329 = vmul.f32 %v182, %v317
    %v330 = vmul.f32 %v183, %v313
    %v331 = vmul.f32 %v184, %v317
    %v332 = vmul.f32 %v185, %v313
    %v333 = vmul.f32 %v186, %v317
    %v334 = vmul.f32 %v189, %v313
    %v335 = vmul.f32 %v190, %v317
    %v336 = vmul.f32 %v191, %v313
    %v337 = vmul.f32 %v192, %v317
    %v338 = vmul.f32 %v193, %v313
    %v339 = vmul.f32 %v194, %v317
    %v340 = vmul.f32 %v195, %v313
    %v341 = vmul.f32 %v196, %v317
    %v342 = vmul.f32 %v197, %v313
    %v343 = vmul.f32 %v198, %v317
    %v344 = vmul.f32 %v199, %v313
    %v345 = vmul.f32 %v200, %v317
    %v346 = vmul.f32 %v201, %v313
    %v347 = vmul.f32 %v202, %v317
    %v348 = vadd.f32 %v305, %v318
    %v349 = vadd.f32 %v309, %v319
    %v350 = vadd.f32 %v305, %v320
    %v351 = vadd.f32 %v309, %v321
    %v352 = vadd.f32 %v305, %v322
    %v353 = vadd.f32 %v309, %v323
    %v354 = vadd.f32 %v305, %v324
    %v355 = vadd.f32 %v309, %v325
    %v356 = vadd.f32 %v305, %v326
    %v357 = vadd.f32 %v309, %v327
    %v358 = vadd.f32 %v305, %v328
    %v359 = vadd.f32 %v309, %v329
    %v360 = vadd.f32 %v305, %v330
    %v361 = vadd.f32 %v309, %v331
    %v362 = vadd.f32 %v305, %v332
    %v363 = vadd.f32 %v309, %v333
    %v364 = vadd.f32 %v305, %v334
    %v365 = vadd.f32 %v309, %v335
    %v366 = vadd.f32 %v305, %v336
    %v367 = vadd.f32 %v309, %v337
    %v368 = vadd.f32 %v305, %v338
    %v369 = vadd.f32 %v309, %v339
    %v370 = vadd.f32 %v305, %v340
    %v371 = vadd.f32 %v309, %v341
    %v372 = vadd.f32 %v305, %v342
    %v373 = vadd.f32 %v309, %v343
    %v374 = vadd.f32 %v305, %v344
    %v375 = vadd.f32 %v309, %v345
    %v376 = vadd.f32 %v305, %v346
    %v377 = vadd.f32 %v309, %v347
    %v378 = vlaneseq
    %v379 = vshrl.u32 %v378, 7
    %v380 = vsub.s32 1, %v379
    %v381 = vrot.slane %v72, %v380
    %v382 = vlaneseq
    %v383 = vshrl.u32 %v382, 7
    %v384 = vsub.s32 1, %v383
    %v385 = vrot.slane %v73, %v384
    %v386 = vmul.f32 %v381, 0.0
    %v387 = vmul.f32 %v385, 0.0
    %v388 = vmul.f32 %v40, %v381
    %v389 = vmul.f32 %v41, %v385
    %v390 = vmul.f32 %v42, %v381
    %v391 = vmul.f32 %v43, %v385
    %v392 = vmul.f32 %v44, %v381
    %v393 = vmul.f32 %v45, %v385
    %v394 = vmul.f32 %v46, %v381
    %v395 = vmul.f32 %v47, %v385
    %v396 = vmul.f32 %v48, %v381
    %v397 = vmul.f32 %v49, %v385
    %v398 = vmul.f32 %v50, %v381
    %v399 = vmul.f32 %v51, %v385
    %v400 = vmul.f32 %v52, %v381
    %v401 = vmul.f32 %v53, %v385
    %v402 = vmul.f32 %v56, %v381
    %v403 = vmul.f32 %v57, %v385
    %v404 = vmul.f32 %v58, %v381
    %v405 = vmul.f32 %v59, %v385
    %v406 = vmul.f32 %v60, %v381
    %v407 = vmul.f32 %v61, %v385
    %v408 = vmul.f32 %v62, %v381
    %v409 = vmul.f32 %v63, %v385
    %v410 = vmul.f32 %v64, %v381
    %v411 = vmul.f32 %v65, %v385
    %v412 = vmul.f32 %v66, %v381
    %v413 = vmul.f32 %v67, %v385
    %v414 = vmul.f32 %v68, %v381
    %v415 = vmul.f32 %v69, %v385
    %v416 = vadd.f32 %v348, %v386
    %v417 = vadd.f32 %v349, %v387
    %v418 = vadd.f32 %v350, %v388
    %v419 = vadd.f32 %v351, %v389
    %v420 = vadd.f32 %v352, %v390
    %v421 = vadd.f32 %v353, %v391
    %v422 = vadd.f32 %v354, %v392
    %v423 = vadd.f32 %v355, %v393
    %v424 = vadd.f32 %v356, %v394
    %v425 = vadd.f32 %v357, %v395
    %v426 = vadd.f32 %v358, %v396
    %v427 = vadd.f32 %v359, %v397
    %v428 = vadd.f32 %v360, %v398
    %v429 = vadd.f32 %v361, %v399
    %v430 = vadd.f32 %v362, %v400
    %v431 = vadd.f32 %v363, %v401
    %v432 = vadd.f32 %v364, %v402
    %v433 = vadd.f32 %v365, %v403
    %v434 = vadd.f32 %v366, %v404
    %v435 = vadd.f32 %v367, %v405
    %v436 = vadd.f32 %v368, %v406
    %v437 = vadd.f32 %v369, %v407
    %v438 = vadd.f32 %v370, %v408
    %v439 = vadd.f32 %v371, %v409
    %v440 = vadd.f32 %v372, %v410
    %v441 = vadd.f32 %v373, %v411
    %v442 = vadd.f32 %v374, %v412
    %v443 = vadd.f32 %v375, %v413
    %v444 = vadd.f32 %v376, %v414
    %v445 = vadd.f32 %v377, %v415
    %v446 = vlaneseq
    %v447 = vshrl.u32 %v446, 7
    %v448 = vsub.s32 2, %v447
    %v449 = vrot.slane %v72, %v448
    %v450 = vlaneseq
    %v451 = vshrl.u32 %v450, 7
    %v452 = vsub.s32 2, %v451
    %v453 = vrot.slane %v73, %v452
    %v454 = vmul.f32 %v449, 0.0
    %v455 = vmul.f32 %v453, 0.0
    %v456 = vmul.f32 %v270, %v449
    %v457 = vmul.f32 %v271, %v453
    %v458 = vmul.f32 %v272, %v449
    %v459 = vmul.f32 %v273, %v453
    %v460 = vmul.f32 %v274, %v449
    %v461 = vmul.f32 %v275, %v453
    %v462 = vmul.f32 %v276, %v449
    %v463 = vmul.f32 %v277, %v453
    %v464 = vmul.f32 %v278, %v449
    %v465 = vmul.f32 %v279, %v453
    %v466 = vmul.f32 %v280, %v449
    %v467 = vmul.f32 %v281, %v453
    %v468 = vmul.f32 %v282, %v449
    %v469 = vmul.f32 %v283, %v453
    %v470 = vmul.f32 %v286, %v449
    %v471 = vmul.f32 %v287, %v453
    %v472 = vmul.f32 %v288, %v449
    %v473 = vmul.f32 %v289, %v453
    %v474 = vmul.f32 %v290, %v449
    %v475 = vmul.f32 %v291, %v453
    %v476 = vmul.f32 %v292, %v449
    %v477 = vmul.f32 %v293, %v453
    %v478 = vmul.f32 %v294, %v449
    %v479 = vmul.f32 %v295, %v453
    %v480 = vmul.f32 %v296, %v449
    %v481 = vmul.f32 %v297, %v453
    %v482 = vmul.f32 %v298, %v449
    %v483 = vmul.f32 %v299, %v453
    %v484 = vadd.f32 %v416, %v454
    %v485 = vadd.f32 %v417, %v455
    %v486 = vadd.f32 %v418, %v456
    %v487 = vadd.f32 %v419, %v457
    %v488 = vadd.f32 %v420, %v458
    %v489 = vadd.f32 %v421, %v459
    %v490 = vadd.f32 %v422, %v460
    %v491 = vadd.f32 %v423, %v461
    %v492 = vadd.f32 %v424, %v462
    %v493 = vadd.f32 %v425, %v463
    %v494 = vadd.f32 %v426, %v464
    %v495 = vadd.f32 %v427, %v465
    %v496 = vadd.f32 %v428, %v466
    %v497 = vadd.f32 %v429, %v467
    %v498 = vadd.f32 %v430, %v468
    %v499 = vadd.f32 %v431, %v469
    %v500 = vadd.f32 %v432, %v470
    %v501 = vadd.f32 %v433, %v471
    %v502 = vadd.f32 %v434, %v472
    %v503 = vadd.f32 %v435, %v473
    %v504 = vadd.f32 %v436, %v474
    %v505 = vadd.f32 %v437, %v475
    %v506 = vadd.f32 %v438, %v476
    %v507 = vadd.f32 %v439, %v477
    %v508 = vadd.f32 %v440, %v478
    %v509 = vadd.f32 %v441, %v479
    %v510 = vadd.f32 %v442, %v480
    %v511 = vadd.f32 %v443, %v481
    %v512 = vadd.f32 %v444, %v482
    %v513 = vadd.f32 %v445, %v483
    %v514 = vlaneseq
    %v515 = vshrl.u32 %v514, 7
    %v516 = vsub.s32 3, %v515
    %v517 = vrot.slane %v72, %v516
    %v518 = vlaneseq
    %v519 = vshrl.u32 %v518, 7
    %v520 = vsub.s32 3, %v519
    %v521 = vrot.slane %v73, %v520
    %v522 = vmul.f32 %v173, %v517
    %v523 = vmul.f32 %v174, %v521
    %v524 = vmul.f32 %v175, %v517
    %v525 = vmul.f32 %v176, %v521
    %v526 = vmul.f32 %v177, %v517
    %v527 = vmul.f32 %v178, %v521
    %v528 = vmul.f32 %v179, %v517
    %v529 = vmul.f32 %v180, %v521
    %v530 = vmul.f32 %v181, %v517
    %v531 = vmul.f32 %v182, %v521
    %v532 = vmul.f32 %v183, %v517
    %v533 = vmul.f32 %v184, %v521
    %v534 = vmul.f32 %v185, %v517
    %v535 = vmul.f32 %v186, %v521
    %v536 = vmul.f32 %v187, %v517
    %v537 = vmul.f32 %v188, %v521
    %v538 = vmul.f32 %v189, %v517
    %v539 = vmul.f32 %v190, %v521
    %v540 = vmul.f32 %v191, %v517
    %v541 = vmul.f32 %v192, %v521
    %v542 = vmul.f32 %v193, %v517
    %v543 = vmul.f32 %v194, %v521
    %v544 = vmul.f32 %v195, %v517
    %v545 = vmul.f32 %v196, %v521
    %v546 = vmul.f32 %v197, %v517
    %v547 = vmul.f32 %v198, %v521
    %v548 = vmul.f32 %v199, %v517
    %v549 = vmul.f32 %v200, %v521
    %v550 = vmul.f32 %v201, %v517
    %v551 = vmul.f32 %v202, %v521
    %v552 = vmul.f32 %v203, %v517
    %v553 = vmul.f32 %v204, %v521
    %v554 = vadd.f32 %v484, %v522
    %v555 = vadd.f32 %v485, %v523
    %v556 = vadd.f32 %v486, %v524
    %v557 = vadd.f32 %v487, %v525
    %v558 = vadd.f32 %v488, %v526
    %v559 = vadd.f32 %v489, %v527
    %v560 = vadd.f32 %v490, %v528
    %v561 = vadd.f32 %v491, %v529
    %v562 = vadd.f32 %v492, %v530
    %v563 = vadd.f32 %v493, %v531
    %v564 = vadd.f32 %v494, %v532
    %v565 = vadd.f32 %v495, %v533
    %v566 = vadd.f32 %v496, %v534
    %v567 = vadd.f32 %v497, %v535
    %v568 = vadd.f32 %v498, %v536
    %v569 = vadd.f32 %v499, %v537
    %v570 = vadd.f32 %v484, %v538
    %v571 = vadd.f32 %v485, %v539
    %v572 = vadd.f32 %v500, %v540
    %v573 = vadd.f32 %v501, %v541
    %v574 = vadd.f32 %v502, %v542
    %v575 = vadd.f32 %v503, %v543
    %v576 = vadd.f32 %v504, %v544
    %v577 = vadd.f32 %v505, %v545
    %v578 = vadd.f32 %v506, %v546
    %v579 = vadd.f32 %v507, %v547
    %v580 = vadd.f32 %v508, %v548
    %v581 = vadd.f32 %v509, %v549
    %v582 = vadd.f32 %v510, %v550
    %v583 = vadd.f32 %v511, %v551
    %v584 = vadd.f32 %v512, %v552
    %v585 = vadd.f32 %v513, %v553
    %v586 = vlaneseq
    %v587 = vshrl.u32 %v586, 7
    %v588 = vsub.s32 4, %v587
    %v589 = vrot.slane %v72, %v588
    %v590 = vlaneseq
    %v591 = vshrl.u32 %v590, 7
    %v592 = vsub.s32 4, %v591
    %v593 = vrot.slane %v73, %v592
    %v594 = vmul.f32 %v40, %v589
    %v595 = vmul.f32 %v41, %v593
    %v596 = vmul.f32 %v42, %v589
    %v597 = vmul.f32 %v43, %v593
    %v598 = vmul.f32 %v44, %v589
    %v599 = vmul.f32 %v45, %v593
    %v600 = vmul.f32 %v46, %v589
    %v601 = vmul.f32 %v47, %v593
    %v602 = vmul.f32 %v48, %v589
    %v603 = vmul.f32 %v49, %v593
    %v604 = vmul.f32 %v50, %v589
    %v605 = vmul.f32 %v51, %v593
    %v606 = vmul.f32 %v52, %v589
    %v607 = vmul.f32 %v53, %v593
    %v608 = vmul.f32 %v54, %v589
    %v609 = vmul.f32 %v55, %v593
    %v610 = vmul.f32 %v56, %v589
    %v611 = vmul.f32 %v57, %v593
    %v612 = vmul.f32 %v58, %v589
    %v613 = vmul.f32 %v59, %v593
    %v614 = vmul.f32 %v60, %v589
    %v615 = vmul.f32 %v61, %v593
    %v616 = vmul.f32 %v62, %v589
    %v617 = vmul.f32 %v63, %v593
    %v618 = vmul.f32 %v64, %v589
    %v619 = vmul.f32 %v65, %v593
    %v620 = vmul.f32 %v66, %v589
    %v621 = vmul.f32 %v67, %v593
    %v622 = vmul.f32 %v68, %v589
    %v623 = vmul.f32 %v69, %v593
    %v624 = vmul.f32 %v70, %v589
    %v625 = vmul.f32 %v71, %v593
    %v626 = vadd.f32 %v554, %v594
    %v627 = vadd.f32 %v555, %v595
    %v628 = vadd.f32 %v556, %v596
    %v629 = vadd.f32 %v557, %v597
    %v630 = vadd.f32 %v558, %v598
    %v631 = vadd.f32 %v559, %v599
    %v632 = vadd.f32 %v560, %v600
    %v633 = vadd.f32 %v561, %v601
    %v634 = vadd.f32 %v562, %v602
    %v635 = vadd.f32 %v563, %v603
    %v636 = vadd.f32 %v564, %v604
    %v637 = vadd.f32 %v565, %v605
    %v638 = vadd.f32 %v566, %v606
    %v639 = vadd.f32 %v567, %v607
    %v640 = vadd.f32 %v568, %v608
    %v641 = vadd.f32 %v569, %v609
    %v642 = vadd.f32 %v570, %v610
    %v643 = vadd.f32 %v571, %v611
    %v644 = vadd.f32 %v572, %v612
    %v645 = vadd.f32 %v573, %v613
    %v646 = vadd.f32 %v574, %v614
    %v647 = vadd.f32 %v575, %v615
    %v648 = vadd.f32 %v576, %v616
    %v649 = vadd.f32 %v577, %v617
    %v650 = vadd.f32 %v578, %v618
    %v651 = vadd.f32 %v579, %v619
    %v652 = vadd.f32 %v580, %v620
    %v653 = vadd.f32 %v581, %v621
    %v654 = vadd.f32 %v582, %v622
    %v655 = vadd.f32 %v583, %v623
    %v656 = vadd.f32 %v584, %v624
    %v657 = vadd.f32 %v585, %v625
    %v658 = vlaneseq
    %v659 = vshrl.u32 %v658, 7
    %v660 = vsub.s32 5, %v659
    %v661 = vrot.slane %v72, %v660
    %v662 = vlaneseq
    %v663 = vshrl.u32 %v662, 7
    %v664 = vsub.s32 5, %v663
    %v665 = vrot.slane %v73, %v664
    %v666 = vmul.f32 %v270, %v661
    %v667 = vmul.f32 %v271, %v665
    %v668 = vmul.f32 %v272, %v661
    %v669 = vmul.f32 %v273, %v665
    %v670 = vmul.f32 %v274, %v661
    %v671 = vmul.f32 %v275, %v665
    %v672 = vmul.f32 %v276, %v661
    %v673 = vmul.f32 %v277, %v665
    %v674 = vmul.f32 %v278, %v661
    %v675 = vmul.f32 %v279, %v665
    %v676 = vmul.f32 %v280, %v661
    %v677 = vmul.f32 %v281, %v665
    %v678 = vmul.f32 %v282, %v661
    %v679 = vmul.f32 %v283, %v665
    %v680 = vmul.f32 %v284, %v661
    %v681 = vmul.f32 %v285, %v665
    %v682 = vmul.f32 %v286, %v661
    %v683 = vmul.f32 %v287, %v665
    %v684 = vmul.f32 %v288, %v661
    %v685 = vmul.f32 %v289, %v665
    %v686 = vmul.f32 %v290, %v661
    %v687 = vmul.f32 %v291, %v665
    %v688 = vmul.f32 %v292, %v661
    %v689 = vmul.f32 %v293, %v665
    %v690 = vmul.f32 %v294, %v661
    %v691 = vmul.f32 %v295, %v665
    %v692 = vmul.f32 %v296, %v661
    %v693 = vmul.f32 %v297, %v665
    %v694 = vmul.f32 %v298, %v661
    %v695 = vmul.f32 %v299, %v665
    %v696 = vmul.f32 %v300, %v661
    %v697 = vmul.f32 %v301, %v665
    %v698 = vadd.f32 %v626, %v666
    %v699 = vadd.f32 %v627, %v667
    %v700 = vadd.f32 %v628, %v668
    %v701 = vadd.f32 %v629, %v669
    %v702 = vadd.f32 %v630, %v670
    %v703 = vadd.f32 %v631, %v671
    %v704 = vadd.f32 %v632, %v672
    %v705 = vadd.f32 %v633, %v673
    %v706 = vadd.f32 %v634, %v674
    %v707 = vadd.f32 %v635, %v675
    %v708 = vadd.f32 %v636, %v676
    %v709 = vadd.f32 %v637, %v677
    %v710 = vadd.f32 %v638, %v678
    %v711 = vadd.f32 %v639, %v679
    %v712 = vadd.f32 %v640, %v680
    %v713 = vadd.f32 %v641, %v681
    %v714 = vadd.f32 %v642, %v682
    %v715 = vadd.f32 %v643, %v683
    %v716 = vadd.f32 %v644, %v684
    %v717 = vadd.f32 %v645, %v685
    %v718 = vadd.f32 %v646, %v686
    %v719 = vadd.f32 %v647, %v687
    %v720 = vadd.f32 %v648, %v688
    %v721 = vadd.f32 %v649, %v689
    %v722 = vadd.f32 %v650, %v690
    %v723 = vadd.f32 %v651, %v691
    %v724 = vadd.f32 %v652, %v692
    %v725 = vadd.f32 %v653, %v693
    %v726 = vadd.f32 %v654, %v694
    %v727 = vadd.f32 %v655, %v695
    %v728 = vadd.f32 %v656, %v696
    %v729 = vadd.f32 %v657, %v697
    %v730 = vlaneseq
    %v731 = vshrl.u32 %v730, 7
    %v732 = vsub.s32 6, %v731
    %v733 = vrot.slane %v72, %v732
    %v734 = vlaneseq
    %v735 = vshrl.u32 %v734, 7
    %v736 = vsub.s32 6, %v735
    %v737 = vrot.slane %v73, %v736
    %v738 = vmul.f32 %v175, %v733
    %v739 = vmul.f32 %v176, %v737
    %v740 = vmul.f32 %v177, %v733
    %v741 = vmul.f32 %v178, %v737
    %v742 = vmul.f32 %v179, %v733
    %v743 = vmul.f32 %v180, %v737
    %v744 = vmul.f32 %v181, %v733
    %v745 = vmul.f32 %v182, %v737
    %v746 = vmul.f32 %v183, %v733
    %v747 = vmul.f32 %v184, %v737
    %v748 = vmul.f32 %v185, %v733
    %v749 = vmul.f32 %v186, %v737
    %v750 = vmul.f32 %v187, %v733
    %v751 = vmul.f32 %v188, %v737
    %v752 = vmul.f32 %v733, 0.0
    %v753 = vmul.f32 %v737, 0.0
    %v754 = vmul.f32 %v191, %v733
    %v755 = vmul.f32 %v192, %v737
    %v756 = vmul.f32 %v193, %v733
    %v757 = vmul.f32 %v194, %v737
    %v758 = vmul.f32 %v195, %v733
    %v759 = vmul.f32 %v196, %v737
    %v760 = vmul.f32 %v197, %v733
    %v761 = vmul.f32 %v198, %v737
    %v762 = vmul.f32 %v199, %v733
    %v763 = vmul.f32 %v200, %v737
    %v764 = vmul.f32 %v201, %v733
    %v765 = vmul.f32 %v202, %v737
    %v766 = vmul.f32 %v203, %v733
    %v767 = vmul.f32 %v204, %v737
    %v768 = vadd.f32 %v698, %v738
    %v769 = vadd.f32 %v699, %v739
    %v770 = vadd.f32 %v700, %v740
    %v771 = vadd.f32 %v701, %v741
    %v772 = vadd.f32 %v702, %v742
    %v773 = vadd.f32 %v703, %v743
    %v774 = vadd.f32 %v704, %v744
    %v775 = vadd.f32 %v705, %v745
    %v776 = vadd.f32 %v706, %v746
    %v777 = vadd.f32 %v707, %v747
    %v778 = vadd.f32 %v708, %v748
    %v779 = vadd.f32 %v709, %v749
    %v780 = vadd.f32 %v710, %v750
    %v781 = vadd.f32 %v711, %v751
    %v782 = vadd.f32 %v712, %v752
    %v783 = vadd.f32 %v713, %v753
    %v784 = vadd.f32 %v714, %v754
    %v785 = vadd.f32 %v715, %v755
    %v786 = vadd.f32 %v716, %v756
    %v787 = vadd.f32 %v717, %v757
    %v788 = vadd.f32 %v718, %v758
    %v789 = vadd.f32 %v719, %v759
    %v790 = vadd.f32 %v720, %v760
    %v791 = vadd.f32 %v721, %v761
    %v792 = vadd.f32 %v722, %v762
    %v793 = vadd.f32 %v723, %v763
    %v794 = vadd.f32 %v724, %v764
    %v795 = vadd.f32 %v725, %v765
    %v796 = vadd.f32 %v726, %v766
    %v797 = vadd.f32 %v727, %v767
    %v798 = vadd.f32 %v728, %v752
    %v799 = vadd.f32 %v729, %v753
    %v800 = vlaneseq
    %v801 = vshrl.u32 %v800, 7
    %v802 = vsub.s32 7, %v801
    %v803 = vrot.slane %v72, %v802
    %v804 = vlaneseq
    %v805 = vshrl.u32 %v804, 7
    %v806 = vsub.s32 7, %v805
    %v807 = vrot.slane %v73, %v806
    %v808 = vmul.f32 %v42, %v803
    %v809 = vmul.f32 %v43, %v807
    %v810 = vmul.f32 %v44, %v803
    %v811 = vmul.f32 %v45, %v807
    %v812 = vmul.f32 %v46, %v803
    %v813 = vmul.f32 %v47, %v807
    %v814 = vmul.f32 %v48, %v803
    %v815 = vmul.f32 %v49, %v807
    %v816 = vmul.f32 %v50, %v803
    %v817 = vmul.f32 %v51, %v807
    %v818 = vmul.f32 %v52, %v803
    %v819 = vmul.f32 %v53, %v807
    %v820 = vmul.f32 %v54, %v803
    %v821 = vmul.f32 %v55, %v807
    %v822 = vmul.f32 %v803, 0.0
    %v823 = vmul.f32 %v807, 0.0
    %v824 = vmul.f32 %v58, %v803
    %v825 = vmul.f32 %v59, %v807
    %v826 = vmul.f32 %v60, %v803
    %v827 = vmul.f32 %v61, %v807
    %v828 = vmul.f32 %v62, %v803
    %v829 = vmul.f32 %v63, %v807
    %v830 = vmul.f32 %v64, %v803
    %v831 = vmul.f32 %v65, %v807
    %v832 = vmul.f32 %v66, %v803
    %v833 = vmul.f32 %v67, %v807
    %v834 = vmul.f32 %v68, %v803
    %v835 = vmul.f32 %v69, %v807
    %v836 = vmul.f32 %v70, %v803
    %v837 = vmul.f32 %v71, %v807
    %v838 = vadd.f32 %v768, %v808
    %v839 = vadd.f32 %v769, %v809
    %v840 = vadd.f32 %v770, %v810
    %v841 = vadd.f32 %v771, %v811
    %v842 = vadd.f32 %v772, %v812
    %v843 = vadd.f32 %v773, %v813
    %v844 = vadd.f32 %v774, %v814
    %v845 = vadd.f32 %v775, %v815
    %v846 = vadd.f32 %v776, %v816
    %v847 = vadd.f32 %v777, %v817
    %v848 = vadd.f32 %v778, %v818
    %v849 = vadd.f32 %v779, %v819
    %v850 = vadd.f32 %v780, %v820
    %v851 = vadd.f32 %v781, %v821
    %v852 = vadd.f32 %v782, %v822
    %v853 = vadd.f32 %v783, %v823
    %v854 = vadd.f32 %v784, %v824
    %v855 = vadd.f32 %v785, %v825
    %v856 = vadd.f32 %v786, %v826
    %v857 = vadd.f32 %v787, %v827
    %v858 = vadd.f32 %v788, %v828
    %v859 = vadd.f32 %v789, %v829
    %v860 = vadd.f32 %v790, %v830
    %v861 = vadd.f32 %v791, %v831
    %v862 = vadd.f32 %v792, %v832
    %v863 = vadd.f32 %v793, %v833
    %v864 = vadd.f32 %v794, %v834
    %v865 = vadd.f32 %v795, %v835
    %v866 = vadd.f32 %v796, %v836
    %v867 = vadd.f32 %v797, %v837
    %v868 = vadd.f32 %v798, %v822
    %v869 = vadd.f32 %v799, %v823
    %v870 = vlaneseq
    %v871 = vshrl.u32 %v870, 7
    %v872 = vsub.s32 0, %v871
    %v873 = vrot.slane %v74, %v872
    %v874 = vlaneseq
    %v875 = vshrl.u32 %v874, 7
    %v876 = vsub.s32 0, %v875
    %v877 = vrot.slane %v75, %v876
    %v878 = vmul.f32 %v272, %v873
    %v879 = vmul.f32 %v273, %v877
    %v880 = vmul.f32 %v274, %v873
    %v881 = vmul.f32 %v275, %v877
    %v882 = vmul.f32 %v276, %v873
    %v883 = vmul.f32 %v277, %v877
    %v884 = vmul.f32 %v278, %v873
    %v885 = vmul.f32 %v279, %v877
    %v886 = vmul.f32 %v280, %v873
    %v887 = vmul.f32 %v281, %v877
    %v888 = vmul.f32 %v282, %v873
    %v889 = vmul.f32 %v283, %v877
    %v890 = vmul.f32 %v284, %v873
    %v891 = vmul.f32 %v285, %v877
    %v892 = vmul.f32 %v873, 0.0
    %v893 = vmul.f32 %v877, 0.0
    %v894 = vmul.f32 %v288, %v873
    %v895 = vmul.f32 %v289, %v877
    %v896 = vmul.f32 %v290, %v873
    %v897 = vmul.f32 %v291, %v877
    %v898 = vmul.f32 %v292, %v873
    %v899 = vmul.f32 %v293, %v877
    %v900 = vmul.f32 %v294, %v873
    %v901 = vmul.f32 %v295, %v877
    %v902 = vmul.f32 %v296, %v873
    %v903 = vmul.f32 %v297, %v877
    %v904 = vmul.f32 %v298, %v873
    %v905 = vmul.f32 %v299, %v877
    %v906 = vmul.f32 %v300, %v873
    %v907 = vmul.f32 %v301, %v877
    %v908 = vadd.f32 %v838, %v878
    %v909 = vadd.f32 %v839, %v879
    %v910 = vadd.f32 %v840, %v880
    %v911 = vadd.f32 %v841, %v881
    %v912 = vadd.f32 %v842, %v882
    %v913 = vadd.f32 %v843, %v883
    %v914 = vadd.f32 %v844, %v884
    %v915 = vadd.f32 %v845, %v885
    %v916 = vadd.f32 %v846, %v886
    %v917 = vadd.f32 %v847, %v887
    %v918 = vadd.f32 %v848, %v888
    %v919 = vadd.f32 %v849, %v889
    %v920 = vadd.f32 %v850, %v890
    %v921 = vadd.f32 %v851, %v891
    %v922 = vadd.f32 %v852, %v892
    %v923 = vadd.f32 %v853, %v893
    %v924 = vadd.f32 %v854, %v894
    %v925 = vadd.f32 %v855, %v895
    %v926 = vadd.f32 %v856, %v896
    %v927 = vadd.f32 %v857, %v897
    %v928 = vadd.f32 %v858, %v898
    %v929 = vadd.f32 %v859, %v899
    %v930 = vadd.f32 %v860, %v900
    %v931 = vadd.f32 %v861, %v901
    %v932 = vadd.f32 %v862, %v902
    %v933 = vadd.f32 %v863, %v903
    %v934 = vadd.f32 %v864, %v904
    %v935 = vadd.f32 %v865, %v905
    %v936 = vadd.f32 %v866, %v906
    %v937 = vadd.f32 %v867, %v907
    %v938 = vadd.f32 %v868, %v892
    %v939 = vadd.f32 %v869, %v893
    %940 = vst [vmem:[#allocation7] sm:$0xff] %v908
    %941 = vst [vmem:[#allocation7 + $0x8] sm:$0xff] %v909
    %942 = vst [vmem:[#allocation7 + $0x10] sm:$0xff] %v910
    %943 = vst [vmem:[#allocation7 + $0x18] sm:$0xff] %v911
    %944 = vst [vmem:[#allocation7 + $0x20] sm:$0xff] %v912
    %945 = vst [vmem:[#allocation7 + $0x28] sm:$0xff] %v913
    %946 = vst [vmem:[#allocation7 + $0x30] sm:$0xff] %v914
    %947 = vst [vmem:[#allocation7 + $0x38] sm:$0xff] %v915
    %948 = vst [vmem:[#allocation7 + $0x40] sm:$0xff] %v916
    %949 = vst [vmem:[#allocation7 + $0x48] sm:$0xff] %v917
    %950 = vst [vmem:[#allocation7 + $0x50] sm:$0xff] %v918
    %951 = vst [vmem:[#allocation7 + $0x58] sm:$0xff] %v919
    %952 = vst [vmem:[#allocation7 + $0x60] sm:$0xff] %v920
    %953 = vst [vmem:[#allocation7 + $0x68] sm:$0xff] %v921
    %954 = vst [vmem:[#allocation7 + $0x70] sm:$0xff] %v922
    %955 = vst [vmem:[#allocation7 + $0x78] sm:$0xff] %v923
    %956 = vst [vmem:[#allocation7 + $0x80] sm:$0xff] %v924
    %957 = vst [vmem:[#allocation7 + $0x88] sm:$0xff] %v925
    %958 = vst [vmem:[#allocation7 + $0x90] sm:$0xff] %v926
    %959 = vst [vmem:[#allocation7 + $0x98] sm:$0xff] %v927
    %960 = vst [vmem:[#allocation7 + $0xa0] sm:$0xff] %v928
    %961 = vst [vmem:[#allocation7 + $0xa8] sm:$0xff] %v929
    %962 = vst [vmem:[#allocation7 + $0xb0] sm:$0xff] %v930
    %963 = vst [vmem:[#allocation7 + $0xb8] sm:$0xff] %v931
    %964 = vst [vmem:[#allocation7 + $0xc0] sm:$0xff] %v932
    %965 = vst [vmem:[#allocation7 + $0xc8] sm:$0xff] %v933
    %966 = vst [vmem:[#allocation7 + $0xd0] sm:$0xff] %v934
    %967 = vst [vmem:[#allocation7 + $0xd8] sm:$0xff] %v935
    %968 = vst [vmem:[#allocation7 + $0xe0] sm:$0xff] %v936
    %969 = vst [vmem:[#allocation7 + $0xe8] sm:$0xff] %v937
    %970 = vst [vmem:[#allocation7 + $0xf0] sm:$0xff] %v938
    %971 = vst [vmem:[#allocation7 + $0xf8] sm:$0xff] %v939
    // Predicated region
    $region18: #{tpu_custom_call.1} parent=1 // pred_check
      _
    $region19: #{tpu_custom_call.1} parent=1 // pred_check_branch
      %973 = sbr.rel (0) target = $region21
    $region20: #{tpu_custom_call.1} parent=1 // pred_region
      %s975 = ssub.s32 4096, 4096
      %976 = vsyncadd [#allocation4], %s975
      %s977 = sshll.u32 [#allocation7], 4
      %s978 = int_to_ptr.vmem [resolvable:$true] %s977
      %983 = dma.vmem_to_hbm [thread:$0]  %s978, 4096, %s2, [#allocation4], 256, 256, 16
    $region21: #{tpu_custom_call.1} parent=1 // pred_fallthru
      _
    // Predicated region
    $region22: #{tpu_custom_call.1} parent=1 // pred_check
      _
    $region23: #{tpu_custom_call.1} parent=1 // pred_check_branch
      %985 = sbr.rel (0) target = $region25
    $region24: #{tpu_custom_call.1} parent=1 // pred_region
      %986 = dma.done [#allocation4], 4096
    $region25: #{tpu_custom_call.1} parent=1 // pred_fallthru
      _
    %987 = vsyncpa [#allocation3], 1
    %988 = vsyncpa [#allocation6], 1
    %989 = vsyncpa [#allocation4], 1

</llo_original>
